<compile_context>
chip_gen: v7x
topology: tpu7x:2x2x1
jax: 0.10.0
libtpu: 0.0.40
codegen_flags: <defaults>
</compile_context>

<pallas_src>
import functools

import numpy as np
import jax
import jax.numpy as jnp
from jax.experimental import pallas as pl
from jax.experimental.pallas import tpu as pltpu

f32 = jnp.float32
bf16 = jnp.bfloat16


def _round_up(v, m):
    return ((v + m - 1) // m) * m


def _dot_mag(a, b):
    # Log-magnitude accumulation: keep full f32 MXU precision so the log-sum
    # is not demoted (Mosaic supports DEFAULT / HIGHEST; HIGH would not lower).
    return jnp.dot(a, b, preferred_element_type=jnp.float32,
                   precision=jax.lax.Precision.HIGHEST)


def _dot_cnt(a, b):
    # 0/1-valued bf16 operands, exact small-integer sums with f32 accumulation:
    # a single MXU pass is exact.
    return jnp.dot(a, b, preferred_element_type=jnp.float32)


def _cache_x_indicators(x_ref, logx_s, xnz_s, negx_s):
    # The x block is resident across the whole out-feature (j) sweep; compute
    # the elementwise indicators (log, compares) only once per batch tile.
    @pl.when(pl.program_id(1) == 0)
    def _():
        x = x_ref[...].astype(f32)
        x_nz = x != 0.0
        # log(where(nz, |x|, 1)) == where(nz, log|x|, 0) with one fewer select
        # and no -inf intermediates.
        logx_s[...] = jnp.log(jnp.where(x_nz, jnp.abs(x), 1.0))
        xnz_s[...] = jnp.where(x_nz, 1.0, 0.0).astype(bf16)
        negx_s[...] = jnp.where(x < 0.0, 1.0, 0.0).astype(bf16)


def _finalize(out_ref, sum_log, nz_cnt, neg_cnt):
    # (-1)^neg_cnt via parity; neg_cnt / nz_cnt are exact small integers (f32).
    parity = neg_cnt - 2.0 * jnp.floor(neg_cnt * 0.5)
    sign = 1.0 - 2.0 * parity
    prod = sign * jnp.exp(sum_log)
    out_ref[...] = jnp.where(nz_cnt > 0.5, prod, 0.0).astype(out_ref.dtype)


def _cn_kernel_binary(x_ref, mask_ref, out_ref, logx_s, xnz_s, negx_s):
    # layer_mask entries are exactly {0, 1} (LDPC parity-check mask).
    _cache_x_indicators(x_ref, logx_s, xnz_s, negx_s)
    mt_bf = mask_ref[...]                              # (K, tn) bf16, {0,1}
    sum_log = _dot_mag(logx_s[...], mt_bf.astype(f32))  # 6-pass f32
    nz_cnt = _dot_cnt(xnz_s[...], mt_bf)                # 1-pass, exact
    neg_cnt = _dot_cnt(negx_s[...], mt_bf)              # 1-pass, exact
    _finalize(out_ref, sum_log, nz_cnt, neg_cnt)


def _cn_kernel_general(x_ref, mnz_ref, logm_ref, negm_ref, out_ref,
                       logx_s, xnz_s, negx_s):
    # General (signed / non-unit) mask; mask indicators are precomputed in the
    # wrapper and streamed as inputs (mask is constant across the batch).
    _cache_x_indicators(x_ref, logx_s, xnz_s, negx_s)
    mnz_bf = mnz_ref[...]                               # (K, tn) bf16 {0,1}
    negm_bf = negm_ref[...]                             # (K, tn) bf16 {0,1}
    logm = logm_ref[...]                                # (K, tn) f32 (0 at m==0)
    xnz_f = xnz_s[...].astype(f32)                      # exact 0/1
    sum_log = (_dot_mag(logx_s[...], mnz_bf.astype(f32))
               + _dot_mag(xnz_f, logm))
    nz_cnt = _dot_cnt(xnz_s[...], mnz_bf)
    # #negatives = |x<0 & m!=0| + |x!=0 & m<0| - 2*|x<0 & m<0|  (XOR count)
    neg_cnt = (_dot_cnt(negx_s[...], mnz_bf)
               + _dot_cnt(xnz_s[...], negm_bf)
               - 2.0 * _dot_cnt(negx_s[...], negm_bf))
    _finalize(out_ref, sum_log, nz_cnt, neg_cnt)


def cn_update_forward(x, layer_mask, *, mask_is_binary=True,
                      batch_tile=512, out_tile=512,
                      vmem_budget_bytes=40 * 1024 * 1024):
    """Pallas implementation of CnUpdateLayer.forward.

    x          : (batch, in_features) float32
    layer_mask : (out_features, in_features) float32
    returns    : (batch, out_features) float32
    """
    batch, in_features = x.shape
    out_features, in_features_m = layer_mask.shape
    assert in_features == in_features_m
    K = in_features

    # ---- tile selection -------------------------------------------------
    tb = min(batch_tile, _round_up(batch, 8))
    # v7x has 2 TensorCores: keep >= 2 grid steps on the "parallel" batch axis
    # whenever the batch allows it (the j axis is "arbitrary" -> one core).
    if batch > 8 and _round_up(batch, tb) // tb < 2:
        tb = _round_up((batch + 1) // 2, 8)
    tn = min(out_tile, _round_up(out_features, 128))

    # VMEM working-set budget: double-buffered in/out blocks + scratch.
    # (v7x: 64 MiB physical VMEM per core / 32 MiB default scoped limit.)
    def _vmem_bytes(tb_, tn_):
        mask_bytes = K * tn_ * (2 if mask_is_binary else 8)   # bf16 / bf16+f32+bf16
        return (2 * (tb_ * K * 4 + mask_bytes + tb_ * tn_ * 4)
                + tb_ * K * 8)                                 # scratch (f32+2*bf16)

    while _vmem_bytes(tb, tn) > vmem_budget_bytes and tn > 128:
        tn = max(128, _round_up(tn // 2, 128))
    while _vmem_bytes(tb, tn) > vmem_budget_bytes and tb > 8:
        tb = max(8, _round_up(tb // 2, 8))

    b_pad = _round_up(batch, tb)
    n_pad = _round_up(out_features, tn)

    # ---- operand preparation (mask indicators precomputed once) ----------
    x_p = x.astype(f32)
    if b_pad != batch:
        x_p = jnp.pad(x_p, ((0, b_pad - batch), (0, 0)))

    mask_t = layer_mask.astype(f32).T                     # (K, N), lane = out feat
    if n_pad != out_features:
        mask_t = jnp.pad(mask_t, ((0, 0), (0, n_pad - out_features)))

    if mask_is_binary:
        # {0,1} is exactly representable in bf16 -> half the mask DMA traffic.
        operands = (x_p, mask_t.astype(bf16))
        kernel = _cn_kernel_binary
    else:
        m_nz = mask_t != 0.0
        operands = (
            x_p,
            m_nz.astype(bf16),                                            # m != 0
            jnp.log(jnp.where(m_nz, jnp.abs(mask_t), 1.0)).astype(f32),   # log|m|
            (mask_t < 0.0).astype(bf16),                                  # m < 0
        )
        kernel = _cn_kernel_general

    x_spec = pl.BlockSpec((tb, K), lambda i, j: (i, 0))
    mask_spec = pl.BlockSpec((K, tn), lambda i, j: (0, j))
    in_specs = [x_spec] + [mask_spec] * (len(operands) - 1)

    grid = (b_pad // tb, n_pad // tn)
    out = pl.pallas_call(
        kernel,
        out_shape=jax.ShapeDtypeStruct((b_pad, n_pad), x.dtype),
        grid_spec=pltpu.PrefetchScalarGridSpec(
            num_scalar_prefetch=0,
            grid=grid,
            in_specs=in_specs,
            out_specs=pl.BlockSpec((tb, tn), lambda i, j: (i, j)),
            scratch_shapes=[
                pltpu.VMEM((tb, K), f32),    # log|x| (0 where x == 0)
                pltpu.VMEM((tb, K), bf16),   # x != 0 indicator
                pltpu.VMEM((tb, K), bf16),   # x < 0 indicator
            ]),
        compiler_params=pltpu.CompilerParams(
            # j must be "arbitrary": the x-indicator scratch cache is rebuilt
            # at j == 0 and reused across the j sweep (a megacore-parallel j
            # could start mid-sweep and read an uninitialized cache).
            dimension_semantics=("parallel", "arbitrary"),
            vmem_limit_bytes=48 * 1024 * 1024),
    )(*operands)

    return out[:batch, :out_features]


def cn_update_reference(x, layer_mask):
    """Plain-JAX reference mirroring the PyTorch forward loop (direct product)."""
    xm = x[:, None, :] * layer_mask[None, :, :]
    nz = xm != 0.0
    prod = jnp.prod(jnp.where(nz, xm, 1.0), axis=-1)
    return jnp.where(jnp.any(nz, axis=-1), prod, 0.0)


if __name__ == "__main__":
    key = jax.random.PRNGKey(0)
    k_x, k_z, k_m, k_mv = jax.random.split(key, 4)

    # Small shapes; deliberately not multiples of the tiles -> padding paths,
    # 2 batch tiles (scratch-cache re-init) and 2 out-feature tiles (reuse).
    batch = 20
    in_features = 64
    out_features = 200

    # Input with exact zeros so the zero-handling path is exercised, plus one
    # all-zero row so the "no nonzero masked entry -> 0" gate is hit.
    x_vals = jax.random.normal(k_x, (batch, in_features), dtype=jnp.float32)
    keep = jax.random.uniform(k_z, (batch, in_features)) > 0.3
    x = jnp.where(keep, x_vals, 0.0).astype(jnp.float32)
    x = x.at[0].set(0.0)

    # Binary parity-check-style layer mask (the LDPC use case).
    bin_mask = (jax.random.uniform(k_m, (out_features, in_features)) < 0.25
                ).astype(jnp.float32)

    out = jax.block_until_ready(
        cn_update_forward(x, bin_mask, mask_is_binary=True, out_tile=128))
    ref = cn_update_reference(x, bin_mask)
    np.testing.assert_allclose(np.asarray(out), np.asarray(ref),
                               rtol=1e-3, atol=1e-6)

    # General (signed / non-unit) mask path.
    mask_vals = jax.random.choice(
        k_mv, jnp.array([1.0, -0.5, 2.0], jnp.float32),
        shape=(out_features, in_features))
    gen_mask = bin_mask * mask_vals
    out_g = jax.block_until_ready(
        cn_update_forward(x, gen_mask, mask_is_binary=False, out_tile=128))
    ref_g = cn_update_reference(x, gen_mask)
    np.testing.assert_allclose(np.asarray(out_g), np.asarray(ref_g),
                               rtol=1e-3, atol=1e-6)

    print("KERNEL_OK")
</pallas_src>

<mosaic_0001>
module attributes {stable_mosaic.version = 11 : i64} {
  func.func @_cn_kernel_binary(%arg0: i32, %arg1: i32, %arg2: memref<16x64xf32, #tpu.memory_space<vmem>>, %arg3: memref<64x128xbf16, #tpu.memory_space<vmem>>, %arg4: memref<16x128xf32, #tpu.memory_space<vmem>>, %arg5: memref<16x64xf32, #tpu.memory_space<vmem>>, %arg6: memref<16x64xbf16, #tpu.memory_space<vmem>>, %arg7: memref<16x64xbf16, #tpu.memory_space<vmem>>) attributes {dimension_semantics = [#tpu.dimension_semantics<parallel>, #tpu.dimension_semantics<arbitrary>], iteration_bounds = array<i64: 2, 2>, scalar_prefetch = 0 : i64, scratch_operands = 3 : i64, tpu.core_type = #tpu.core_type<tc>, window_params = [{transform_indices = @transform_0, window_bounds = array<i64: 16, 64>}, {transform_indices = @transform_1, window_bounds = array<i64: 64, 128>}, {transform_indices = @transform_2, window_bounds = array<i64: 16, 128>}]} {
    %c0_i32 = arith.constant 0 : i32
    %0 = arith.cmpi eq, %arg1, %c0_i32 : i32
    %1 = arith.extui %0 : i1 to i32
    %c0_i32_0 = arith.constant 0 : i32
    %2 = arith.cmpi ne, %1, %c0_i32_0 : i32
    scf.if %2 {
      %c0_18 = arith.constant 0 : index
      %c0_19 = arith.constant 0 : index
      %28 = vector.load %arg2[%c0_18, %c0_19] : memref<16x64xf32, #tpu.memory_space<vmem>>, vector<16x64xf32>
      %cst_20 = arith.constant 0.000000e+00 : f32
      %29 = vector.broadcast %cst_20 : f32 to vector<16x64xf32>
      %30 = arith.cmpf one, %28, %29 : vector<16x64xf32>
      %31 = math.absf %28 : vector<16x64xf32>
      %cst_21 = arith.constant 1.000000e+00 : f32
      %32 = vector.broadcast %cst_21 : f32 to vector<16x64xf32>
      %33 = arith.select %30, %31, %32 : vector<16x64xi1>, vector<16x64xf32>
      %34 = math.log %33 : vector<16x64xf32>
      %c0_22 = arith.constant 0 : index
      %c0_23 = arith.constant 0 : index
      %35 = vector.load %arg5[%c0_22, %c0_23] : memref<16x64xf32, #tpu.memory_space<vmem>>, vector<16x64xf32>
      tpu.vector_store %arg5[%c0_22, %c0_23], %34 {strides = array<i32>} : memref<16x64xf32, #tpu.memory_space<vmem>>, vector<16x64xf32>,
      %cst_24 = arith.constant 1.000000e+00 : f32
      %cst_25 = arith.constant 0.000000e+00 : f32
      %36 = vector.broadcast %cst_24 : f32 to vector<16x64xf32>
      %37 = vector.broadcast %cst_25 : f32 to vector<16x64xf32>
      %38 = arith.select %30, %36, %37 : vector<16x64xi1>, vector<16x64xf32>
      %39 = arith.truncf %38 : vector<16x64xf32> to vector<16x64xbf16>
      %c0_26 = arith.constant 0 : index
      %c0_27 = arith.constant 0 : index
      %40 = vector.load %arg6[%c0_26, %c0_27] : memref<16x64xbf16, #tpu.memory_space<vmem>>, vector<16x64xbf16>
      tpu.vector_store %arg6[%c0_26, %c0_27], %39 {strides = array<i32>} : memref<16x64xbf16, #tpu.memory_space<vmem>>, vector<16x64xbf16>,
      %cst_28 = arith.constant 0.000000e+00 : f32
      %41 = vector.broadcast %cst_28 : f32 to vector<16x64xf32>
      %42 = arith.cmpf olt, %28, %41 : vector<16x64xf32>
      %cst_29 = arith.constant 1.000000e+00 : f32
      %cst_30 = arith.constant 0.000000e+00 : f32
      %43 = vector.broadcast %cst_29 : f32 to vector<16x64xf32>
      %44 = vector.broadcast %cst_30 : f32 to vector<16x64xf32>
      %45 = arith.select %42, %43, %44 : vector<16x64xi1>, vector<16x64xf32>
      %46 = arith.truncf %45 : vector<16x64xf32> to vector<16x64xbf16>
      %c0_31 = arith.constant 0 : index
      %c0_32 = arith.constant 0 : index
      %47 = vector.load %arg7[%c0_31, %c0_32] : memref<16x64xbf16, #tpu.memory_space<vmem>>, vector<16x64xbf16>
      tpu.vector_store %arg7[%c0_31, %c0_32], %46 {strides = array<i32>} : memref<16x64xbf16, #tpu.memory_space<vmem>>, vector<16x64xbf16>,
    } else {
    }
    %c0 = arith.constant 0 : index
    %c0_1 = arith.constant 0 : index
    %3 = vector.load %arg3[%c0, %c0_1] : memref<64x128xbf16, #tpu.memory_space<vmem>>, vector<64x128xbf16>
    %c0_2 = arith.constant 0 : index
    %c0_3 = arith.constant 0 : index
    %4 = vector.load %arg5[%c0_2, %c0_3] : memref<16x64xf32, #tpu.memory_space<vmem>>, vector<16x64xf32>
    %5 = arith.extf %3 : vector<64x128xbf16> to vector<64x128xf32>
    %cst = arith.constant dense<0.000000e+00> : vector<16x128xf32>
    %6 = tpu.matmul %4, %5, %cst {dimension_numbers = #tpu.dot_dimension_numbers<[1], [0], [0], [1], [0, 0, 1, 1], [], []>, precision = #tpu.contract_precision<fp32>} : vector<16x64xf32>, vector<64x128xf32>, vector<16x128xf32> -> vector<16x128xf32>
    %c0_4 = arith.constant 0 : index
    %c0_5 = arith.constant 0 : index
    %7 = vector.load %arg6[%c0_4, %c0_5] : memref<16x64xbf16, #tpu.memory_space<vmem>>, vector<16x64xbf16>
    %cst_6 = arith.constant dense<0.000000e+00> : vector<16x128xf32>
    %8 = tpu.matmul %7, %3, %cst_6 {dimension_numbers = #tpu.dot_dimension_numbers<[1], [0], [0], [1], [0, 0, 1, 1], [], []>} : vector<16x64xbf16>, vector<64x128xbf16>, vector<16x128xf32> -> vector<16x128xf32>
    %c0_7 = arith.constant 0 : index
    %c0_8 = arith.constant 0 : index
    %9 = vector.load %arg7[%c0_7, %c0_8] : memref<16x64xbf16, #tpu.memory_space<vmem>>, vector<16x64xbf16>
    %cst_9 = arith.constant dense<0.000000e+00> : vector<16x128xf32>
    %10 = tpu.matmul %9, %3, %cst_9 {dimension_numbers = #tpu.dot_dimension_numbers<[1], [0], [0], [1], [0, 0, 1, 1], [], []>} : vector<16x64xbf16>, vector<64x128xbf16>, vector<16x128xf32> -> vector<16x128xf32>
    %cst_10 = arith.constant 5.000000e-01 : f32
    %11 = vector.broadcast %cst_10 : f32 to vector<16x128xf32>
    %12 = arith.mulf %10, %11 : vector<16x128xf32>
    %13 = math.floor %12 : vector<16x128xf32>
    %cst_11 = arith.constant 2.000000e+00 : f32
    %14 = vector.broadcast %cst_11 : f32 to vector<16x128xf32>
    %15 = arith.mulf %14, %13 : vector<16x128xf32>
    %16 = arith.subf %10, %15 : vector<16x128xf32>
    %cst_12 = arith.constant 2.000000e+00 : f32
    %17 = vector.broadcast %cst_12 : f32 to vector<16x128xf32>
    %18 = arith.mulf %17, %16 : vector<16x128xf32>
    %cst_13 = arith.constant 1.000000e+00 : f32
    %19 = vector.broadcast %cst_13 : f32 to vector<16x128xf32>
    %20 = arith.subf %19, %18 : vector<16x128xf32>
    %21 = math.exp %6 : vector<16x128xf32>
    %22 = arith.mulf %20, %21 : vector<16x128xf32>
    %cst_14 = arith.constant 5.000000e-01 : f32
    %23 = vector.broadcast %cst_14 : f32 to vector<16x128xf32>
    %24 = arith.cmpf ogt, %8, %23 : vector<16x128xf32>
    %cst_15 = arith.constant 0.000000e+00 : f32
    %25 = vector.broadcast %cst_15 : f32 to vector<16x128xf32>
    %26 = arith.select %24, %22, %25 : vector<16x128xi1>, vector<16x128xf32>
    %c0_16 = arith.constant 0 : index
    %c0_17 = arith.constant 0 : index
    %27 = vector.load %arg4[%c0_16, %c0_17] : memref<16x128xf32, #tpu.memory_space<vmem>>, vector<16x128xf32>
    tpu.vector_store %arg4[%c0_16, %c0_17], %26 {strides = array<i32>} : memref<16x128xf32, #tpu.memory_space<vmem>>, vector<16x128xf32>,
    return
  }
  func.func @transform_0(%arg0: i32, %arg1: i32) -> (i32, i32) {
    %c0_i32 = arith.constant 0 : i32
    %c0_i32_0 = arith.constant 0 : i32
    return %arg0, %c0_i32 : i32, i32
  }
  func.func @transform_1(%arg0: i32, %arg1: i32) -> (i32, i32) {
    %c0_i32 = arith.constant 0 : i32
    %c0_i32_0 = arith.constant 0 : i32
    return %c0_i32, %arg1 : i32, i32
  }
  func.func @transform_2(%arg0: i32, %arg1: i32) -> (i32, i32) {
    %c0_i32 = arith.constant 0 : i32
    return %arg0, %arg1 : i32, i32
  }
}

</mosaic_0001>

<llo_original>
// kernel: tpu_custom_call.1
$region0: #{tpu_custom_call.1}
  #allocation0 [shape = 'u32[]', space=smem, size = 0x4, offset = 0x4, fixed_abs, tag = 'smem constant byte address 0x4 - core index']
  #allocation1 [shape = 'u32[144,128]{1,0:T(1,128)}', space=vmem, size = 0x12000, scoped, tag = 'internal scratch']
  #allocation2 [shape = 'f32[16,64]{1,0:T(8,128)}', space=vmem, size = 0x2000, scoped, tag = 'scratch operand']
  #allocation3 [shape = 'bf16[16,64]{1,0:T(16,128)(2,1)}', space=vmem, size = 0x1000, scoped, tag = 'scratch operand']
  #allocation4 [shape = 'bf16[16,64]{1,0:T(16,128)(2,1)}', space=vmem, size = 0x1000, scoped, tag = 'scratch operand']
  %s0 = inlined_call_operand.hbm [shape: f32[32,64], index: 0, kind: input, shape index: {}]
  %s1 = inlined_call_operand.hbm [shape: bf16[64,256], index: 1, kind: input, shape index: {}]
  %s2 = inlined_call_operand.hbm [shape: f32[32,256], index: 2, kind: output, shape index: {}]
  %s3 = sld [smem:[#allocation0]]
  $region53: #{tpu_custom_call.1} parent=0
    _
  %s5 = ssub.s32 1, %s3
  %s6 = scalar_select 0, %s5, %s3
  $region1: #{tpu_custom_call.1} parent=0
    #allocation5 [shape = 'u8[16384]{0}', space=vmem, size = 0x4000, scoped, tag = 'input window, operand 0']
    #allocation6 [shape = 's32[2]{0}', space=sflag, size = 0x8, scoped, tag = 'scoped memory for tpu_custom_call.1']
    #allocation7 [shape = 's32[2]{0}', space=sflag, size = 0x8, scoped, tag = 'scoped memory for tpu_custom_call.1']
    #allocation8 [shape = 'u8[32768]{0}', space=vmem, size = 0x8000, scoped, tag = 'input window, operand 1']
    #allocation9 [shape = 's32[2]{0}', space=sflag, size = 0x8, scoped, tag = 'scoped memory for tpu_custom_call.1']
    #allocation10 [shape = 'u8[16384]{0}', space=vmem, size = 0x4000, scoped, tag = 'output window, operand 0']
    %7 = vsyncpa [#allocation6], 0
    %s8 = scalar_lea.sflag [#allocation6], 1
    %9 = vsyncpa %s8, 0
    %10 = vsyncpa [#allocation9], 0
    %s11 = scalar_lea.sflag [#allocation9], 1
    %12 = vsyncpa %s11, 0
    %13 = vsyncpa [#allocation7], 0
    %s14 = scalar_lea.sflag [#allocation7], 1
    %15 = vsyncpa %s14, 0
    loop: start=0, step=1, limit=6
    $region2: #{tpu_custom_call.1} parent=1 // loop_pre_header
      _
    $region3: #{tpu_custom_call.1} parent=1 // loop_header
      %s17 = sphi 0, %s21
      %p18 = scmp.ge.s32.totalorder %s17, 6
      %s24 = sphi 0, %s36
      %s25 = sphi 0, %s32
      %s26 = sphi 0, %s24
      %s27 = sphi 0, %s25
      %s28 = sphi 0, %s26
      %s29 = sphi 0, %s27
      %s39 = sphi 0, %s41
      %s42 = sphi 0, %s39
      %s43 = sphi 0, %s42
      %s59 = sphi 0, %s43
      %s65 = sphi 0, %s67
      %s68 = sphi 0, %s65
      %s69 = sphi 0, %s68
      %s85 = sphi 0, %s69
      %s93 = sphi 0, %s95
      %s96 = sphi 0, %s93
      %s97 = sphi 0, %s96
      %s113 = sphi 0, %s97
    $region4: #{tpu_custom_call.1} parent=1 // loop_header_branch
      %20 = sbr.rel (%p18) target = $region8
    $region5: #{tpu_custom_call.1} parent=1 // loop_body
      %s22 = ssub.s32 %s17, 1
      %s23 = ssub.s32 %s17, 2
      %s30 = sadd.s32 1, %s25
      %p31 = scmp.ge.s32.totalorder %s30, 2
      %s32 = scalar_select %p31, 0, %s30
      %s33 = sadd.s32 1, %s24
      %s34 = scalar_select %p31, %s33, %s24
      %p35 = scmp.ge.s32.totalorder %s34, 2
      %s36 = scalar_select %p35, 0, %s34
      %s37 = ssub.s32 %s24, %s36
      %p38 = scmp.eq.s32.totalorder %s37, 0
      %s40 = sadd.s32 %s39, 1
      %s41 = scalar_select %p38, %s39, %s40
      %p44 = pneg %p38
      %p45 = scmp.eq.s32.totalorder %s17, 3
      %p46 = por %p44, %p45
      %p47 = scmp.ne.s32.totalorder %s39, %s42
      %p48 = scmp.eq.s32.totalorder %s17, 0
      %p49 = por %p47, %p48
      %p50 = scmp.ne.s32.totalorder %s39, %s42
      %p51 = scmp.eq.s32.totalorder %s22, 3
      %p52 = por %p50, %p51
      %p53 = scmp.ne.s32.totalorder %s42, %s43
      %p54 = scmp.eq.s32.totalorder %s22, 0
      %p55 = por %p53, %p54
      %p56 = scmp.ne.s32.totalorder %s42, %s43
      %p57 = scmp.eq.s32.totalorder %s23, 3
      %p58 = por %p56, %p57
      %p60 = scmp.ne.s32.totalorder %s43, %s59
      %p61 = scmp.eq.s32.totalorder %s23, 0
      %p62 = por %p60, %p61
      %s63 = ssub.s32 %s25, %s32
      %p64 = scmp.eq.s32.totalorder %s63, 0
      %s66 = sadd.s32 %s65, 1
      %s67 = scalar_select %p64, %s65, %s66
      %p70 = pneg %p64
      %p71 = scmp.eq.s32.totalorder %s17, 3
      %p72 = por %p70, %p71
      %p73 = scmp.ne.s32.totalorder %s65, %s68
      %p74 = scmp.eq.s32.totalorder %s17, 0
      %p75 = por %p73, %p74
      %p76 = scmp.ne.s32.totalorder %s65, %s68
      %p77 = scmp.eq.s32.totalorder %s22, 3
      %p78 = por %p76, %p77
      %p79 = scmp.ne.s32.totalorder %s68, %s69
      %p80 = scmp.eq.s32.totalorder %s22, 0
      %p81 = por %p79, %p80
      %p82 = scmp.ne.s32.totalorder %s68, %s69
      %p83 = scmp.eq.s32.totalorder %s23, 3
      %p84 = por %p82, %p83
      %p86 = scmp.ne.s32.totalorder %s69, %s85
      %p87 = scmp.eq.s32.totalorder %s23, 0
      %p88 = por %p86, %p87
      %s89 = ssub.s32 %s24, %s36
      %s90 = ssub.s32 %s25, %s32
      %s91 = sor.u32 %s89, %s90
      %p92 = scmp.eq.s32.totalorder %s91, 0
      %s94 = sadd.s32 %s93, 1
      %s95 = scalar_select %p92, %s93, %s94
      %p98 = pneg %p92
      %p99 = scmp.eq.s32.totalorder %s17, 3
      %p100 = por %p98, %p99
      %p101 = scmp.ne.s32.totalorder %s93, %s96
      %p102 = scmp.eq.s32.totalorder %s17, 0
      %p103 = por %p101, %p102
      %p104 = scmp.ne.s32.totalorder %s93, %s96
      %p105 = scmp.eq.s32.totalorder %s22, 3
      %p106 = por %p104, %p105
      %p107 = scmp.ne.s32.totalorder %s96, %s97
      %p108 = scmp.eq.s32.totalorder %s22, 0
      %p109 = por %p107, %p108
      %p110 = scmp.ne.s32.totalorder %s96, %s97
      %p111 = scmp.eq.s32.totalorder %s23, 3
      %p112 = por %p110, %p111
      %p114 = scmp.ne.s32.totalorder %s97, %s113
      %p115 = scmp.eq.s32.totalorder %s23, 0
      %p116 = por %p114, %p115
      %p117 = scmp.le.s32.totalorder 1, %s17
      %p118 = scmp.lt.s32.totalorder %s17, 5
      %p119 = pnand %p117, %p118
      %p120 = pneg %p119
      // Predicated region
      $region9: #{tpu_custom_call.1} parent=5 // pred_check
        _
      $region10: #{tpu_custom_call.1} parent=5 // pred_check_branch
        %122 = sbr.rel (%p119) target = $region12
      $region11: #{tpu_custom_call.1} parent=5 // pred_region
        %s123 = ssub.s32 %s17, 1
      $region12: #{tpu_custom_call.1} parent=5 // pred_fallthru
        _
      %p124 = scmp.lt.s32.totalorder %s17, 4
      // Predicated region
      $region13: #{tpu_custom_call.1} parent=5 // pred_check
        %p125 = pneg %p124
      $region14: #{tpu_custom_call.1} parent=5 // pred_check_branch
        %127 = sbr.rel (%p125) target = $region16
      $region15: #{tpu_custom_call.1} parent=5 // pred_region
        // Predicated region
        $region17: #{tpu_custom_call.1} parent=15 // pred_check
          %p128 = pneg %p49
        $region18: #{tpu_custom_call.1} parent=15 // pred_check_branch
          %130 = sbr.rel (%p128) target = $region20
        $region19: #{tpu_custom_call.1} parent=15 // pred_region
          %s131 = sand.u32 %s39, 1
          %s132 = scalar_lea.sflag [#allocation6], %s131
          %s133 = sand.u32 %s39, 1
          %s134 = smul.addr %s133, 16
          %s135 = scalar_lea.vmem [#allocation5], %s134
          %s136 = smul.u32 2, %s24
          %s138 = ssub.s32 256, 256
          %139 = vsyncadd %s132, %s138
          %s140 = smul.addr %s136, 128
          %s141 = scalar_lea.hbm %s0, %s140
          %s142 = sshll.u32 %s135, 4
          %s143 = int_to_ptr.vmem [resolvable:$true] %s142
          %148 = dma.hbm_to_vmem [thread:$0]  %s141, 256, %s143, %s132, 128, 128, 8
        $region20: #{tpu_custom_call.1} parent=15 // pred_fallthru
          _
        // Predicated region
        $region21: #{tpu_custom_call.1} parent=15 // pred_check
          %p149 = pneg %p75
        $region22: #{tpu_custom_call.1} parent=15 // pred_check_branch
          %151 = sbr.rel (%p149) target = $region24
        $region23: #{tpu_custom_call.1} parent=15 // pred_region
          %s152 = sand.u32 %s65, 1
          %s153 = scalar_lea.sflag [#allocation9], %s152
          %s154 = sand.u32 %s65, 1
          %s155 = smul.addr %s154, 32
          %s156 = scalar_lea.vmem [#allocation8], %s155
          %s158 = ssub.s32 512, 512
          %159 = vsyncadd %s153, %s158
          %s160 = smul.addr %s25, 64
          %s161 = scalar_lea.hbm %s1, %s160
          %s162 = sshll.u32 %s156, 4
          %s163 = int_to_ptr.vmem [resolvable:$true] %s162
          %168 = dma.hbm_to_vmem [thread:$0]  %s161, 512, %s163, %s153, 128, 64, 4
        $region24: #{tpu_custom_call.1} parent=15 // pred_fallthru
          _
      $region16: #{tpu_custom_call.1} parent=5 // pred_fallthru
        _
      %p169 = scmp.le.s32.totalorder 1, %s17
      %p170 = scmp.lt.s32.totalorder %s17, 5
      %p171 = pnand %p169, %p170
      %p172 = pneg %p171
      // Predicated region
      $region25: #{tpu_custom_call.1} parent=5 // pred_check
        _
      $region26: #{tpu_custom_call.1} parent=5 // pred_check_branch
        %174 = sbr.rel (%p171) target = $region28
      $region27: #{tpu_custom_call.1} parent=5 // pred_region
        %s175 = ssub.s32 %s17, 1
        %s176 = sand.u32 %s42, 1
        %s177 = scalar_lea.sflag [#allocation6], %s176
        %s178 = sand.u32 %s42, 1
        %s179 = smul.addr %s178, 16
        %s180 = scalar_lea.vmem [#allocation5], %s179
        // Predicated region
        $region29: #{tpu_custom_call.1} parent=27 // pred_check
          %p181 = pneg %p55
        $region30: #{tpu_custom_call.1} parent=27 // pred_check_branch
          %183 = sbr.rel (%p181) target = $region32
        $region31: #{tpu_custom_call.1} parent=27 // pred_region
          %184 = dma.done %s177, 256
        $region32: #{tpu_custom_call.1} parent=27 // pred_fallthru
          _
        %s185 = sand.u32 %s68, 1
        %s186 = scalar_lea.sflag [#allocation9], %s185
        %s187 = sand.u32 %s68, 1
        %s188 = smul.addr %s187, 32
        %s189 = scalar_lea.vmem [#allocation8], %s188
        // Predicated region
        $region33: #{tpu_custom_call.1} parent=27 // pred_check
          %p190 = pneg %p81
        $region34: #{tpu_custom_call.1} parent=27 // pred_check_branch
          %192 = sbr.rel (%p190) target = $region36
        $region35: #{tpu_custom_call.1} parent=27 // pred_region
          %193 = dma.done %s186, 512
        $region36: #{tpu_custom_call.1} parent=27 // pred_fallthru
          _
        %s194 = sand.u32 %s42, 1
        %s195 = scalar_lea.sflag [#allocation6], %s194
        %s196 = sand.u32 %s42, 1
        %s197 = smul.addr %s196, 16
        %s198 = scalar_lea.vmem [#allocation5], %s197
        %p199 = pneg %p55
        %p200 = pneg %p52
        %s201 = sand.u32 %s68, 1
        %s202 = scalar_lea.sflag [#allocation9], %s201
        %s203 = sand.u32 %s68, 1
        %s204 = smul.addr %s203, 32
        %s205 = scalar_lea.vmem [#allocation8], %s204
        %p206 = pneg %p81
        %p207 = pneg %p78
        %p208 = pneg %p109
        %p209 = pneg %p106
        %s210 = sand.u32 %s96, 1
        %s211 = scalar_lea.sflag [#allocation7], %s210
        %s212 = sand.u32 %s96, 1
        %s213 = smul.addr %s212, 16
        %s214 = scalar_lea.vmem [#allocation10], %s213
        %s215 = smul.u32 2, %s26
        %s216 = smul.u32 2, %s26
        %p218 = scmp.eq.s32.totalorder %s27, 0
        // Predicated region
        $region37: #{tpu_custom_call.1} parent=27 // pred_check
          %p219 = pneg %p218
        $region38: #{tpu_custom_call.1} parent=27 // pred_check_branch
          %221 = sbr.rel (%p219) target = $region40
        $region39: #{tpu_custom_call.1} parent=27 // pred_region
          %v222 = vld [vmem:[%s180] sm:$0xff]
          %v223 = vld [vmem:[%s180 + $0x8] sm:$0xff]
          %vm224 = vcmp.ne.f32.partialorder %v222, 0.0
          %vm225 = vcmp.ne.f32.partialorder %v223, 0.0
          %v226 = vand.u32 2147483647, %v222
          %v227 = vand.u32 2147483647, %v223
          %v228 = vsel %vm224, %v226, 1.0
          %v229 = vsel %vm225, %v227, 1.0
          %v230 = vlog2.pop %v228
          %v231 = vmul.f32 %v230, 0.6931472
          %v232 = vlog2.pop %v229
          %v233 = vmul.f32 %v232, 0.6931472
          %vm234 = vcmask 523264
          %235 = vst.msk [vmem:[#allocation2] sm:$0xff] %vm234, %v231
          %236 = vst.msk [vmem:[#allocation2 + $0x8] sm:$0xff] %vm234, %v233
          %v237 = vsel %vm224, 1.0, 0.0
          %v238 = vsel %vm225, 1.0, 0.0
          %v239 = vpack.c.bf16 %v238, %v237
          %240 = vst.msk [vmem:[#allocation3] sm:$0xff] %vm234, %v239
          %vm241 = vcmp.lt.f32.partialorder %v222, 0.0
          %vm242 = vcmp.lt.f32.partialorder %v223, 0.0
          %v243 = vsel %vm241, 1.0, 0.0
          %v244 = vsel %vm242, 1.0, 0.0
          %v245 = vpack.c.bf16 %v244, %v243
          %246 = vst.msk [vmem:[#allocation4] sm:$0xff] %vm234, %v245
        $region40: #{tpu_custom_call.1} parent=27 // pred_fallthru
          _
        %v247 = vld [vmem:[%s189] sm:$0xf]
        %v248 = vld [vmem:[%s189 + $0x4] sm:$0xf]
        %v249 = vld [vmem:[%s189 + $0x8] sm:$0xf]
        %v250 = vld [vmem:[%s189 + $0xc] sm:$0xf]
        %v251 = vld [vmem:[%s189 + $0x10] sm:$0xf]
        %v252 = vld [vmem:[%s189 + $0x14] sm:$0xf]
        %v253 = vld [vmem:[%s189 + $0x18] sm:$0xf]
        %v254 = vld [vmem:[%s189 + $0x1c] sm:$0xf]
        %v255 = vld [vmem:[#allocation2] sm:$0xff]
        %v256 = vld [vmem:[#allocation2 + $0x8] sm:$0xff]
        %v257 = vunpack.c.l.bf16 %v247
        %v258 = vunpack.c.l.bf16 %v248
        %v259 = vunpack.c.l.bf16 %v249
        %v260 = vunpack.c.l.bf16 %v250
        %v261 = vunpack.c.l.bf16 %v251
        %v262 = vunpack.c.l.bf16 %v252
        %v263 = vunpack.c.l.bf16 %v253
        %v264 = vunpack.c.l.bf16 %v254
        %vm265 = vcmask 523264
        %v267 = vsel %vm265, %v255, 0
        %v270 = vsel %vm265, %v256, 0
        %272 = vmatprep.subr.mxu0 0.0
        %273 = vmatpush1.msra.mxu0 %v257
        %274 = vmatprep.subr.mxu0 0.0
        %275 = vmatpush1.msra.mxu0 %v258
        %276 = vmatprep.subr.mxu0 0.0
        %277 = vmatpush1.msra.mxu0 %v259
        %278 = vmatprep.subr.mxu0 0.0
        %279 = vmatpush1.msra.mxu0 %v260
        %280 = vmatprep.subr.mxu0 0.0
        %281 = vmatpush1.msra.mxu0 %v261
        %282 = vmatprep.subr.mxu0 0.0
        %283 = vmatpush1.msra.mxu0 %v262
        %284 = vmatprep.subr.mxu0 0.0
        %285 = vmatpush1.msra.mxu0 %v263
        %286 = vmatprep.subr.mxu0 0.0
        %287 = vmatpush1.msra.mxu0 %v264
        %288 = vmatprep.subr.mxu0 0.0
        %289 = vmatpush1.msra.mxu0 0.0
        %290 = vmatprep.subr.mxu0 0.0
        %291 = vmatpush1.msra.mxu0 0.0
        %292 = vmatprep.subr.mxu0 0.0
        %293 = vmatpush1.msra.mxu0 0.0
        %294 = vmatprep.subr.mxu0 0.0
        %295 = vmatpush1.msra.mxu0 0.0
        %296 = vmatprep.subr.mxu0 0.0
        %297 = vmatpush1.msra.mxu0 0.0
        %298 = vmatprep.subr.mxu0 0.0
        %299 = vmatpush1.msra.mxu0 0.0
        %300 = vmatprep.subr.mxu0 0.0
        %301 = vmatpush1.msra.mxu0 0.0
        %302 = vmatprep.subr.mxu0 0.0
        %303 = vmatpush1.msra.mxu0 0.0
        %304 = vmatprep.subr.mxu0 0.0
        %305 = vmatpush1.msra.mxu0 0.0
        %306 = vmatprep.subr.mxu0 0.0
        %307 = vmatpush1.msra.mxu0 0.0
        %308 = vmatprep.subr.mxu0 0.0
        %309 = vmatpush1.msra.mxu0 0.0
        %310 = vmatprep.subr.mxu0 0.0
        %311 = vmatpush1.msra.mxu0 0.0
        %312 = vmatprep.subr.mxu0 0.0
        %313 = vmatpush1.msra.mxu0 0.0
        %314 = vmatprep.subr.mxu0 0.0
        %315 = vmatpush1.msra.mxu0 0.0
        %316 = vmatprep.subr.mxu0 0.0
        %317 = vmatpush1.msra.mxu0 0.0
        %318 = vmatprep.subr.mxu0 0.0
        %319 = vmatpush1.msra.mxu0 0.0
        %320 = vmatprep.subr.mxu0 0.0
        %321 = vmatpush1.msra.mxu0 0.0
        %322 = vmatprep.subr.mxu0 0.0
        %323 = vmatpush1.msra.mxu0 0.0
        %324 = vmatprep.subr.mxu0 0.0
        %325 = vmatpush1.msra.mxu0 0.0
        %326 = vmatprep.subr.mxu0 0.0
        %327 = vmatpush1.msra.mxu0 0.0
        %328 = vmatprep.subr.mxu0 0.0
        %329 = vmatpush1.msra.mxu0 0.0
        %330 = vmatprep.subr.mxu0 0.0
        %331 = vmatpush1.msra.mxu0 0.0
        %332 = vmatprep.subr.mxu0 0.0
        %333 = vmatpush1.msra.mxu0 0.0
        %334 = vmatprep.subr.mxu0 0.0
        %335 = vmatpush1.msra.mxu0 0.0
        %336 = vmatprep.mubr.f32.mxu0 0.0
        %v337 = vand.u32 %v267, 4294901760
        %v338 = vsub.f32 %v267, %v337
        %v339 = vand.u32 %v338, 4294901760
        %v340 = vsub.f32 %v338, %v339
        %v341 = vand.u32 %v340, 4294901760
        %342 = vmatmul.mubr.f32.gmra.mrb[0].mxu0 %v341
        %v343 = vpop.f32.mrb[0].mxu0
        %v344 = vadd.f32 0.0, %v343
        %v345 = vpop.f32.mrb[0].mxu0
        %346 = vmatprep.mubr.f32.mxu0 0.0
        %v347 = vand.u32 %v270, 4294901760
        %v348 = vsub.f32 %v270, %v347
        %v349 = vand.u32 %v348, 4294901760
        %v350 = vsub.f32 %v348, %v349
        %v351 = vand.u32 %v350, 4294901760
        %352 = vmatmul.mubr.f32.gmra.mrb[0].mxu0 %v351
        %v353 = vpop.f32.mrb[0].mxu0
        %v354 = vadd.f32 0.0, %v353
        %v355 = vpop.f32.mrb[0].mxu0
        %356 = vdwg.mxu0
        %357 = vmatprep.subr.mxu0 0.0
        %v358 = vsub.f32 %v257, %v257
        %v359 = vand.u32 %v358, 4294901760
        %v360 = vsub.f32 %v358, %v359
        %v361 = vand.u32 %v360, 4294901760
        %362 = vmatpush1.msra.mxu0 %v361
        %363 = vmatprep.subr.mxu0 0.0
        %v364 = vsub.f32 %v258, %v258
        %v365 = vand.u32 %v364, 4294901760
        %v366 = vsub.f32 %v364, %v365
        %v367 = vand.u32 %v366, 4294901760
        %368 = vmatpush1.msra.mxu0 %v367
        %369 = vmatprep.subr.mxu0 0.0
        %v370 = vsub.f32 %v259, %v259
        %v371 = vand.u32 %v370, 4294901760
        %v372 = vsub.f32 %v370, %v371
        %v373 = vand.u32 %v372, 4294901760
        %374 = vmatpush1.msra.mxu0 %v373
        %375 = vmatprep.subr.mxu0 0.0
        %v376 = vsub.f32 %v260, %v260
        %v377 = vand.u32 %v376, 4294901760
        %v378 = vsub.f32 %v376, %v377
        %v379 = vand.u32 %v378, 4294901760
        %380 = vmatpush1.msra.mxu0 %v379
        %381 = vmatprep.subr.mxu0 0.0
        %v382 = vsub.f32 %v261, %v261
        %v383 = vand.u32 %v382, 4294901760
        %v384 = vsub.f32 %v382, %v383
        %v385 = vand.u32 %v384, 4294901760
        %386 = vmatpush1.msra.mxu0 %v385
        %387 = vmatprep.subr.mxu0 0.0
        %v388 = vsub.f32 %v262, %v262
        %v389 = vand.u32 %v388, 4294901760
        %v390 = vsub.f32 %v388, %v389
        %v391 = vand.u32 %v390, 4294901760
        %392 = vmatpush1.msra.mxu0 %v391
        %393 = vmatprep.subr.mxu0 0.0
        %v394 = vsub.f32 %v263, %v263
        %v395 = vand.u32 %v394, 4294901760
        %v396 = vsub.f32 %v394, %v395
        %v397 = vand.u32 %v396, 4294901760
        %398 = vmatpush1.msra.mxu0 %v397
        %399 = vmatprep.subr.mxu0 0.0
        %v400 = vsub.f32 %v264, %v264
        %v401 = vand.u32 %v400, 4294901760
        %v402 = vsub.f32 %v400, %v401
        %v403 = vand.u32 %v402, 4294901760
        %404 = vmatpush1.msra.mxu0 %v403
        %405 = vmatprep.subr.mxu0 0.0
        %406 = vmatpush1.msra.mxu0 0.0
        %407 = vmatprep.subr.mxu0 0.0
        %408 = vmatpush1.msra.mxu0 0.0
        %409 = vmatprep.subr.mxu0 0.0
        %410 = vmatpush1.msra.mxu0 0.0
        %411 = vmatprep.subr.mxu0 0.0
        %412 = vmatpush1.msra.mxu0 0.0
        %413 = vmatprep.subr.mxu0 0.0
        %414 = vmatpush1.msra.mxu0 0.0
        %415 = vmatprep.subr.mxu0 0.0
        %416 = vmatpush1.msra.mxu0 0.0
        %417 = vmatprep.subr.mxu0 0.0
        %418 = vmatpush1.msra.mxu0 0.0
        %419 = vmatprep.subr.mxu0 0.0
        %420 = vmatpush1.msra.mxu0 0.0
        %421 = vmatprep.subr.mxu0 0.0
        %422 = vmatpush1.msra.mxu0 0.0
        %423 = vmatprep.subr.mxu0 0.0
        %424 = vmatpush1.msra.mxu0 0.0
        %425 = vmatprep.subr.mxu0 0.0
        %426 = vmatpush1.msra.mxu0 0.0
        %427 = vmatprep.subr.mxu0 0.0
        %428 = vmatpush1.msra.mxu0 0.0
        %429 = vmatprep.subr.mxu0 0.0
        %430 = vmatpush1.msra.mxu0 0.0
        %431 = vmatprep.subr.mxu0 0.0
        %432 = vmatpush1.msra.mxu0 0.0
        %433 = vmatprep.subr.mxu0 0.0
        %434 = vmatpush1.msra.mxu0 0.0
        %435 = vmatprep.subr.mxu0 0.0
        %436 = vmatpush1.msra.mxu0 0.0
        %437 = vmatprep.subr.mxu0 0.0
        %438 = vmatpush1.msra.mxu0 0.0
        %439 = vmatprep.subr.mxu0 0.0
        %440 = vmatpush1.msra.mxu0 0.0
        %441 = vmatprep.subr.mxu0 0.0
        %442 = vmatpush1.msra.mxu0 0.0
        %443 = vmatprep.subr.mxu0 0.0
        %444 = vmatpush1.msra.mxu0 0.0
        %445 = vmatprep.subr.mxu0 0.0
        %446 = vmatpush1.msra.mxu0 0.0
        %447 = vmatprep.subr.mxu0 0.0
        %448 = vmatpush1.msra.mxu0 0.0
        %449 = vmatprep.subr.mxu0 0.0
        %450 = vmatpush1.msra.mxu0 0.0
        %451 = vmatprep.subr.mxu0 0.0
        %452 = vmatpush1.msra.mxu0 0.0
        %453 = vmatprep.mubr.f32.mxu0 0.0
        %v454 = vand.u32 %v267, 4294901760
        %455 = vmatmul.mubr.f32.gmra.mrb[0].mxu0 %v454
        %v456 = vpop.f32.mrb[0].mxu0
        %v457 = vadd.f32 %v344, %v456
        %v458 = vpop.f32.mrb[0].mxu0
        %459 = vmatprep.mubr.f32.mxu0 0.0
        %v460 = vand.u32 %v270, 4294901760
        %461 = vmatmul.mubr.f32.gmra.mrb[0].mxu0 %v460
        %v462 = vpop.f32.mrb[0].mxu0
        %v463 = vadd.f32 %v354, %v462
        %v464 = vpop.f32.mrb[0].mxu0
        %465 = vdwg.mxu0
        %466 = vmatprep.subr.mxu0 0.0
        %v467 = vsub.f32 %v257, %v257
        %468 = vmatpush1.msra.mxu0 %v467
        %469 = vmatprep.subr.mxu0 0.0
        %v470 = vsub.f32 %v258, %v258
        %471 = vmatpush1.msra.mxu0 %v470
        %472 = vmatprep.subr.mxu0 0.0
        %v473 = vsub.f32 %v259, %v259
        %474 = vmatpush1.msra.mxu0 %v473
        %475 = vmatprep.subr.mxu0 0.0
        %v476 = vsub.f32 %v260, %v260
        %477 = vmatpush1.msra.mxu0 %v476
        %478 = vmatprep.subr.mxu0 0.0
        %v479 = vsub.f32 %v261, %v261
        %480 = vmatpush1.msra.mxu0 %v479
        %481 = vmatprep.subr.mxu0 0.0
        %v482 = vsub.f32 %v262, %v262
        %483 = vmatpush1.msra.mxu0 %v482
        %484 = vmatprep.subr.mxu0 0.0
        %v485 = vsub.f32 %v263, %v263
        %486 = vmatpush1.msra.mxu0 %v485
        %487 = vmatprep.subr.mxu0 0.0
        %v488 = vsub.f32 %v264, %v264
        %489 = vmatpush1.msra.mxu0 %v488
        %490 = vmatprep.subr.mxu0 0.0
        %491 = vmatpush1.msra.mxu0 0.0
        %492 = vmatprep.subr.mxu0 0.0
        %493 = vmatpush1.msra.mxu0 0.0
        %494 = vmatprep.subr.mxu0 0.0
        %495 = vmatpush1.msra.mxu0 0.0
        %496 = vmatprep.subr.mxu0 0.0
        %497 = vmatpush1.msra.mxu0 0.0
        %498 = vmatprep.subr.mxu0 0.0
        %499 = vmatpush1.msra.mxu0 0.0
        %500 = vmatprep.subr.mxu0 0.0
        %501 = vmatpush1.msra.mxu0 0.0
        %502 = vmatprep.subr.mxu0 0.0
        %503 = vmatpush1.msra.mxu0 0.0
        %504 = vmatprep.subr.mxu0 0.0
        %505 = vmatpush1.msra.mxu0 0.0
        %506 = vmatprep.subr.mxu0 0.0
        %507 = vmatpush1.msra.mxu0 0.0
        %508 = vmatprep.subr.mxu0 0.0
        %509 = vmatpush1.msra.mxu0 0.0
        %510 = vmatprep.subr.mxu0 0.0
        %511 = vmatpush1.msra.mxu0 0.0
        %512 = vmatprep.subr.mxu0 0.0
        %513 = vmatpush1.msra.mxu0 0.0
        %514 = vmatprep.subr.mxu0 0.0
        %515 = vmatpush1.msra.mxu0 0.0
        %516 = vmatprep.subr.mxu0 0.0
        %517 = vmatpush1.msra.mxu0 0.0
        %518 = vmatprep.subr.mxu0 0.0
        %519 = vmatpush1.msra.mxu0 0.0
        %520 = vmatprep.subr.mxu0 0.0
        %521 = vmatpush1.msra.mxu0 0.0
        %522 = vmatprep.subr.mxu0 0.0
        %523 = vmatpush1.msra.mxu0 0.0
        %524 = vmatprep.subr.mxu0 0.0
        %525 = vmatpush1.msra.mxu0 0.0
        %526 = vmatprep.subr.mxu0 0.0
        %527 = vmatpush1.msra.mxu0 0.0
        %528 = vmatprep.subr.mxu0 0.0
        %529 = vmatpush1.msra.mxu0 0.0
        %530 = vmatprep.subr.mxu0 0.0
        %531 = vmatpush1.msra.mxu0 0.0
        %532 = vmatprep.subr.mxu0 0.0
        %533 = vmatpush1.msra.mxu0 0.0
        %534 = vmatprep.subr.mxu0 0.0
        %535 = vmatpush1.msra.mxu0 0.0
        %536 = vmatprep.subr.mxu0 0.0
        %537 = vmatpush1.msra.mxu0 0.0
        %538 = vmatprep.mubr.f32.mxu0 0.0
        %v539 = vand.u32 %v267, 4294901760
        %v540 = vsub.f32 %v267, %v539
        %541 = vmatmul.mubr.f32.gmra.mrb[0].mxu0 %v540
        %v542 = vpop.f32.mrb[0].mxu0
        %v543 = vadd.f32 %v457, %v542
        %v544 = vpop.f32.mrb[0].mxu0
        %545 = vmatprep.mubr.f32.mxu0 0.0
        %v546 = vand.u32 %v270, 4294901760
        %v547 = vsub.f32 %v270, %v546
        %548 = vmatmul.mubr.f32.gmra.mrb[0].mxu0 %v547
        %v549 = vpop.f32.mrb[0].mxu0
        %v550 = vadd.f32 %v463, %v549
        %v551 = vpop.f32.mrb[0].mxu0
        %552 = vdwg.mxu0
        %553 = vmatprep.subr.mxu0 0.0
        %554 = vmatpush1.msra.mxu0 %v257
        %555 = vmatprep.subr.mxu0 0.0
        %556 = vmatpush1.msra.mxu0 %v258
        %557 = vmatprep.subr.mxu0 0.0
        %558 = vmatpush1.msra.mxu0 %v259
        %559 = vmatprep.subr.mxu0 0.0
        %560 = vmatpush1.msra.mxu0 %v260
        %561 = vmatprep.subr.mxu0 0.0
        %562 = vmatpush1.msra.mxu0 %v261
        %563 = vmatprep.subr.mxu0 0.0
        %564 = vmatpush1.msra.mxu0 %v262
        %565 = vmatprep.subr.mxu0 0.0
        %566 = vmatpush1.msra.mxu0 %v263
        %567 = vmatprep.subr.mxu0 0.0
        %568 = vmatpush1.msra.mxu0 %v264
        %569 = vmatprep.subr.mxu0 0.0
        %570 = vmatpush1.msra.mxu0 0.0
        %571 = vmatprep.subr.mxu0 0.0
        %572 = vmatpush1.msra.mxu0 0.0
        %573 = vmatprep.subr.mxu0 0.0
        %574 = vmatpush1.msra.mxu0 0.0
        %575 = vmatprep.subr.mxu0 0.0
        %576 = vmatpush1.msra.mxu0 0.0
        %577 = vmatprep.subr.mxu0 0.0
        %578 = vmatpush1.msra.mxu0 0.0
        %579 = vmatprep.subr.mxu0 0.0
        %580 = vmatpush1.msra.mxu0 0.0
        %581 = vmatprep.subr.mxu0 0.0
        %582 = vmatpush1.msra.mxu0 0.0
        %583 = vmatprep.subr.mxu0 0.0
        %584 = vmatpush1.msra.mxu0 0.0
        %585 = vmatprep.subr.mxu0 0.0
        %586 = vmatpush1.msra.mxu0 0.0
        %587 = vmatprep.subr.mxu0 0.0
        %588 = vmatpush1.msra.mxu0 0.0
        %589 = vmatprep.subr.mxu0 0.0
        %590 = vmatpush1.msra.mxu0 0.0
        %591 = vmatprep.subr.mxu0 0.0
        %592 = vmatpush1.msra.mxu0 0.0
        %593 = vmatprep.subr.mxu0 0.0
        %594 = vmatpush1.msra.mxu0 0.0
        %595 = vmatprep.subr.mxu0 0.0
        %596 = vmatpush1.msra.mxu0 0.0
        %597 = vmatprep.subr.mxu0 0.0
        %598 = vmatpush1.msra.mxu0 0.0
        %599 = vmatprep.subr.mxu0 0.0
        %600 = vmatpush1.msra.mxu0 0.0
        %601 = vmatprep.subr.mxu0 0.0
        %602 = vmatpush1.msra.mxu0 0.0
        %603 = vmatprep.subr.mxu0 0.0
        %604 = vmatpush1.msra.mxu0 0.0
        %605 = vmatprep.subr.mxu0 0.0
        %606 = vmatpush1.msra.mxu0 0.0
        %607 = vmatprep.subr.mxu0 0.0
        %608 = vmatpush1.msra.mxu0 0.0
        %609 = vmatprep.subr.mxu0 0.0
        %610 = vmatpush1.msra.mxu0 0.0
        %611 = vmatprep.subr.mxu0 0.0
        %612 = vmatpush1.msra.mxu0 0.0
        %613 = vmatprep.subr.mxu0 0.0
        %614 = vmatpush1.msra.mxu0 0.0
        %615 = vmatprep.subr.mxu0 0.0
        %616 = vmatpush1.msra.mxu0 0.0
        %617 = vmatprep.mubr.f32.mxu0 0.0
        %v618 = vand.u32 %v267, 4294901760
        %v619 = vsub.f32 %v267, %v618
        %v620 = vand.u32 %v619, 4294901760
        %621 = vmatmul.mubr.f32.gmra.mrb[0].mxu0 %v620
        %v622 = vpop.f32.mrb[0].mxu0
        %v623 = vadd.f32 %v543, %v622
        %v624 = vpop.f32.mrb[0].mxu0
        %625 = vmatprep.mubr.f32.mxu0 0.0
        %v626 = vand.u32 %v270, 4294901760
        %v627 = vsub.f32 %v270, %v626
        %v628 = vand.u32 %v627, 4294901760
        %629 = vmatmul.mubr.f32.gmra.mrb[0].mxu0 %v628
        %v630 = vpop.f32.mrb[0].mxu0
        %v631 = vadd.f32 %v550, %v630
        %v632 = vpop.f32.mrb[0].mxu0
        %633 = vdwg.mxu0
        %634 = vmatprep.subr.mxu0 0.0
        %v635 = vsub.f32 %v257, %v257
        %v636 = vand.u32 %v635, 4294901760
        %637 = vmatpush1.msra.mxu0 %v636
        %638 = vmatprep.subr.mxu0 0.0
        %v639 = vsub.f32 %v258, %v258
        %v640 = vand.u32 %v639, 4294901760
        %641 = vmatpush1.msra.mxu0 %v640
        %642 = vmatprep.subr.mxu0 0.0
        %v643 = vsub.f32 %v259, %v259
        %v644 = vand.u32 %v643, 4294901760
        %645 = vmatpush1.msra.mxu0 %v644
        %646 = vmatprep.subr.mxu0 0.0
        %v647 = vsub.f32 %v260, %v260
        %v648 = vand.u32 %v647, 4294901760
        %649 = vmatpush1.msra.mxu0 %v648
        %650 = vmatprep.subr.mxu0 0.0
        %v651 = vsub.f32 %v261, %v261
        %v652 = vand.u32 %v651, 4294901760
        %653 = vmatpush1.msra.mxu0 %v652
        %654 = vmatprep.subr.mxu0 0.0
        %v655 = vsub.f32 %v262, %v262
        %v656 = vand.u32 %v655, 4294901760
        %657 = vmatpush1.msra.mxu0 %v656
        %658 = vmatprep.subr.mxu0 0.0
        %v659 = vsub.f32 %v263, %v263
        %v660 = vand.u32 %v659, 4294901760
        %661 = vmatpush1.msra.mxu0 %v660
        %662 = vmatprep.subr.mxu0 0.0
        %v663 = vsub.f32 %v264, %v264
        %v664 = vand.u32 %v663, 4294901760
        %665 = vmatpush1.msra.mxu0 %v664
        %666 = vmatprep.subr.mxu0 0.0
        %667 = vmatpush1.msra.mxu0 0.0
        %668 = vmatprep.subr.mxu0 0.0
        %669 = vmatpush1.msra.mxu0 0.0
        %670 = vmatprep.subr.mxu0 0.0
        %671 = vmatpush1.msra.mxu0 0.0
        %672 = vmatprep.subr.mxu0 0.0
        %673 = vmatpush1.msra.mxu0 0.0
        %674 = vmatprep.subr.mxu0 0.0
        %675 = vmatpush1.msra.mxu0 0.0
        %676 = vmatprep.subr.mxu0 0.0
        %677 = vmatpush1.msra.mxu0 0.0
        %678 = vmatprep.subr.mxu0 0.0
        %679 = vmatpush1.msra.mxu0 0.0
        %680 = vmatprep.subr.mxu0 0.0
        %681 = vmatpush1.msra.mxu0 0.0
        %682 = vmatprep.subr.mxu0 0.0
        %683 = vmatpush1.msra.mxu0 0.0
        %684 = vmatprep.subr.mxu0 0.0
        %685 = vmatpush1.msra.mxu0 0.0
        %686 = vmatprep.subr.mxu0 0.0
        %687 = vmatpush1.msra.mxu0 0.0
        %688 = vmatprep.subr.mxu0 0.0
        %689 = vmatpush1.msra.mxu0 0.0
        %690 = vmatprep.subr.mxu0 0.0
        %691 = vmatpush1.msra.mxu0 0.0
        %692 = vmatprep.subr.mxu0 0.0
        %693 = vmatpush1.msra.mxu0 0.0
        %694 = vmatprep.subr.mxu0 0.0
        %695 = vmatpush1.msra.mxu0 0.0
        %696 = vmatprep.subr.mxu0 0.0
        %697 = vmatpush1.msra.mxu0 0.0
        %698 = vmatprep.subr.mxu0 0.0
        %699 = vmatpush1.msra.mxu0 0.0
        %700 = vmatprep.subr.mxu0 0.0
        %701 = vmatpush1.msra.mxu0 0.0
        %702 = vmatprep.subr.mxu0 0.0
        %703 = vmatpush1.msra.mxu0 0.0
        %704 = vmatprep.subr.mxu0 0.0
        %705 = vmatpush1.msra.mxu0 0.0
        %706 = vmatprep.subr.mxu0 0.0
        %707 = vmatpush1.msra.mxu0 0.0
        %708 = vmatprep.subr.mxu0 0.0
        %709 = vmatpush1.msra.mxu0 0.0
        %710 = vmatprep.subr.mxu0 0.0
        %711 = vmatpush1.msra.mxu0 0.0
        %712 = vmatprep.subr.mxu0 0.0
        %713 = vmatpush1.msra.mxu0 0.0
        %714 = vmatprep.mubr.f32.mxu0 0.0
        %v715 = vand.u32 %v267, 4294901760
        %716 = vmatmul.mubr.f32.gmra.mrb[0].mxu0 %v715
        %v717 = vpop.f32.mrb[0].mxu0
        %v718 = vadd.f32 %v623, %v717
        %v719 = vpop.f32.mrb[0].mxu0
        %720 = vmatprep.mubr.f32.mxu0 0.0
        %v721 = vand.u32 %v270, 4294901760
        %722 = vmatmul.mubr.f32.gmra.mrb[0].mxu0 %v721
        %v723 = vpop.f32.mrb[0].mxu0
        %v724 = vadd.f32 %v631, %v723
        %v725 = vpop.f32.mrb[0].mxu0
        %726 = vdwg.mxu0
        %727 = vmatprep.subr.mxu0 0.0
        %728 = vmatpush1.msra.mxu0 %v257
        %729 = vmatprep.subr.mxu0 0.0
        %730 = vmatpush1.msra.mxu0 %v258
        %731 = vmatprep.subr.mxu0 0.0
        %732 = vmatpush1.msra.mxu0 %v259
        %733 = vmatprep.subr.mxu0 0.0
        %734 = vmatpush1.msra.mxu0 %v260
        %735 = vmatprep.subr.mxu0 0.0
        %736 = vmatpush1.msra.mxu0 %v261
        %737 = vmatprep.subr.mxu0 0.0
        %738 = vmatpush1.msra.mxu0 %v262
        %739 = vmatprep.subr.mxu0 0.0
        %740 = vmatpush1.msra.mxu0 %v263
        %741 = vmatprep.subr.mxu0 0.0
        %742 = vmatpush1.msra.mxu0 %v264
        %743 = vmatprep.subr.mxu0 0.0
        %744 = vmatpush1.msra.mxu0 0.0
        %745 = vmatprep.subr.mxu0 0.0
        %746 = vmatpush1.msra.mxu0 0.0
        %747 = vmatprep.subr.mxu0 0.0
        %748 = vmatpush1.msra.mxu0 0.0
        %749 = vmatprep.subr.mxu0 0.0
        %750 = vmatpush1.msra.mxu0 0.0
        %751 = vmatprep.subr.mxu0 0.0
        %752 = vmatpush1.msra.mxu0 0.0
        %753 = vmatprep.subr.mxu0 0.0
        %754 = vmatpush1.msra.mxu0 0.0
        %755 = vmatprep.subr.mxu0 0.0
        %756 = vmatpush1.msra.mxu0 0.0
        %757 = vmatprep.subr.mxu0 0.0
        %758 = vmatpush1.msra.mxu0 0.0
        %759 = vmatprep.subr.mxu0 0.0
        %760 = vmatpush1.msra.mxu0 0.0
        %761 = vmatprep.subr.mxu0 0.0
        %762 = vmatpush1.msra.mxu0 0.0
        %763 = vmatprep.subr.mxu0 0.0
        %764 = vmatpush1.msra.mxu0 0.0
        %765 = vmatprep.subr.mxu0 0.0
        %766 = vmatpush1.msra.mxu0 0.0
        %767 = vmatprep.subr.mxu0 0.0
        %768 = vmatpush1.msra.mxu0 0.0
        %769 = vmatprep.subr.mxu0 0.0
        %770 = vmatpush1.msra.mxu0 0.0
        %771 = vmatprep.subr.mxu0 0.0
        %772 = vmatpush1.msra.mxu0 0.0
        %773 = vmatprep.subr.mxu0 0.0
        %774 = vmatpush1.msra.mxu0 0.0
        %775 = vmatprep.subr.mxu0 0.0
        %776 = vmatpush1.msra.mxu0 0.0
        %777 = vmatprep.subr.mxu0 0.0
        %778 = vmatpush1.msra.mxu0 0.0
        %779 = vmatprep.subr.mxu0 0.0
        %780 = vmatpush1.msra.mxu0 0.0
        %781 = vmatprep.subr.mxu0 0.0
        %782 = vmatpush1.msra.mxu0 0.0
        %783 = vmatprep.subr.mxu0 0.0
        %784 = vmatpush1.msra.mxu0 0.0
        %785 = vmatprep.subr.mxu0 0.0
        %786 = vmatpush1.msra.mxu0 0.0
        %787 = vmatprep.subr.mxu0 0.0
        %788 = vmatpush1.msra.mxu0 0.0
        %789 = vmatprep.subr.mxu0 0.0
        %790 = vmatpush1.msra.mxu0 0.0
        %791 = vmatprep.mubr.f32.mxu0 0.0
        %v792 = vand.u32 %v267, 4294901760
        %793 = vmatmul.mubr.f32.gmra.mrb[0].mxu0 %v792
        %v794 = vpop.f32.mrb[0].mxu0
        %v795 = vadd.f32 %v718, %v794
        %v796 = vpop.f32.mrb[0].mxu0
        %797 = vmatprep.mubr.f32.mxu0 0.0
        %v798 = vand.u32 %v270, 4294901760
        %799 = vmatmul.mubr.f32.gmra.mrb[0].mxu0 %v798
        %v800 = vpop.f32.mrb[0].mxu0
        %v801 = vadd.f32 %v724, %v800
        %v802 = vpop.f32.mrb[0].mxu0
        %803 = vdwg.mxu0
        %v804 = vld [vmem:[#allocation3] sm:$0xff]
        %v813 = vunpack.c.l.b16 %v247
        %v814 = vunpack.c.l.b16 %v248
        %v815 = vunpack.c.l.b16 %v249
        %v816 = vunpack.c.l.b16 %v250
        %v817 = vunpack.c.l.b16 %v251
        %v818 = vunpack.c.l.b16 %v252
        %v819 = vunpack.c.l.b16 %v253
        %v820 = vunpack.c.l.b16 %v254
        %v821 = vpack.c.b16 %v814, %v813
        %v822 = vpack.c.b16 %v816, %v815
        %v823 = vpack.c.b16 %v818, %v817
        %v824 = vpack.c.b16 %v820, %v819
        %v830 = vsel %vm265, %v804, 0
        %832 = vmatprep.subr.bf16.mxu0 0
        %833 = vmatpush1.bf16.msra.mxu0 %v821
        %834 = vmatprep.subr.bf16.mxu0 0
        %835 = vmatpush1.bf16.msra.mxu0 %v822
        %836 = vmatprep.subr.bf16.mxu0 0
        %837 = vmatpush1.bf16.msra.mxu0 %v823
        %838 = vmatprep.subr.bf16.mxu0 0
        %839 = vmatpush1.bf16.msra.mxu0 %v824
        %840 = vmatprep.subr.bf16.mxu0 0
        %841 = vmatpush1.bf16.msra.mxu0 0
        %842 = vmatprep.subr.bf16.mxu0 0
        %843 = vmatpush1.bf16.msra.mxu0 0
        %844 = vmatprep.subr.bf16.mxu0 0
        %845 = vmatpush1.bf16.msra.mxu0 0
        %846 = vmatprep.subr.bf16.mxu0 0
        %847 = vmatpush1.bf16.msra.mxu0 0
        %848 = vmatprep.subr.bf16.mxu0 0
        %849 = vmatpush1.bf16.msra.mxu0 0
        %850 = vmatprep.subr.bf16.mxu0 0
        %851 = vmatpush1.bf16.msra.mxu0 0
        %852 = vmatprep.subr.bf16.mxu0 0
        %853 = vmatpush1.bf16.msra.mxu0 0
        %854 = vmatprep.subr.bf16.mxu0 0
        %855 = vmatpush1.bf16.msra.mxu0 0
        %856 = vmatprep.subr.bf16.mxu0 0
        %857 = vmatpush1.bf16.msra.mxu0 0
        %858 = vmatprep.subr.bf16.mxu0 0
        %859 = vmatpush1.bf16.msra.mxu0 0
        %860 = vmatprep.subr.bf16.mxu0 0
        %861 = vmatpush1.bf16.msra.mxu0 0
        %862 = vmatprep.subr.bf16.mxu0 0
        %863 = vmatpush1.bf16.msra.mxu0 0
        %864 = vmatprep.mubr.bf16.mxu0 0
        %865 = vmatmul.mubr.bf16.gmra.mrb[0].mxu0 %v830
        %v866 = vpop.f32.mrb[0].mxu0
        %v867 = vadd.f32 0.0, %v866
        %v868 = vpop.f32.mrb[0].mxu0
        %v869 = vpop.f32.mrb[0].mxu0
        %v870 = vadd.f32 0.0, %v869
        %v871 = vpop.f32.mrb[0].mxu0
        %872 = vdwg.mxu0
        %v873 = vld [vmem:[#allocation4] sm:$0xff]
        %v875 = vsel %vm265, %v873, 0
        %877 = vmatprep.subr.bf16.mxu0 0
        %878 = vmatpush1.bf16.msra.mxu0 %v821
        %879 = vmatprep.subr.bf16.mxu0 0
        %880 = vmatpush1.bf16.msra.mxu0 %v822
        %881 = vmatprep.subr.bf16.mxu0 0
        %882 = vmatpush1.bf16.msra.mxu0 %v823
        %883 = vmatprep.subr.bf16.mxu0 0
        %884 = vmatpush1.bf16.msra.mxu0 %v824
        %885 = vmatprep.subr.bf16.mxu0 0
        %886 = vmatpush1.bf16.msra.mxu0 0
        %887 = vmatprep.subr.bf16.mxu0 0
        %888 = vmatpush1.bf16.msra.mxu0 0
        %889 = vmatprep.subr.bf16.mxu0 0
        %890 = vmatpush1.bf16.msra.mxu0 0
        %891 = vmatprep.subr.bf16.mxu0 0
        %892 = vmatpush1.bf16.msra.mxu0 0
        %893 = vmatprep.subr.bf16.mxu0 0
        %894 = vmatpush1.bf16.msra.mxu0 0
        %895 = vmatprep.subr.bf16.mxu0 0
        %896 = vmatpush1.bf16.msra.mxu0 0
        %897 = vmatprep.subr.bf16.mxu0 0
        %898 = vmatpush1.bf16.msra.mxu0 0
        %899 = vmatprep.subr.bf16.mxu0 0
        %900 = vmatpush1.bf16.msra.mxu0 0
        %901 = vmatprep.subr.bf16.mxu0 0
        %902 = vmatpush1.bf16.msra.mxu0 0
        %903 = vmatprep.subr.bf16.mxu0 0
        %904 = vmatpush1.bf16.msra.mxu0 0
        %905 = vmatprep.subr.bf16.mxu0 0
        %906 = vmatpush1.bf16.msra.mxu0 0
        %907 = vmatprep.subr.bf16.mxu0 0
        %908 = vmatpush1.bf16.msra.mxu0 0
        %909 = vmatprep.mubr.bf16.mxu0 0
        %910 = vmatmul.mubr.bf16.gmra.mrb[0].mxu0 %v875
        %v911 = vpop.f32.mrb[0].mxu0
        %v912 = vadd.f32 0.0, %v911
        %v913 = vpop.f32.mrb[0].mxu0
        %v914 = vpop.f32.mrb[0].mxu0
        %v915 = vadd.f32 0.0, %v914
        %v916 = vpop.f32.mrb[0].mxu0
        %917 = vdwg.mxu0
        %v918 = vmul.f32 %v912, 0.5
        %v919 = vmul.f32 %v915, 0.5
        %v920 = vfloor.f32 %v918
        %v921 = vfloor.f32 %v919
        %v922 = vmul.f32 %v920, 2.0
        %v923 = vmul.f32 %v921, 2.0
        %v924 = vsub.f32 %v912, %v922
        %v925 = vsub.f32 %v915, %v923
        %v926 = vmul.f32 %v924, 2.0
        %v927 = vmul.f32 %v925, 2.0
        %v928 = vsub.f32 1.0, %v926
        %v929 = vsub.f32 1.0, %v927
        %v930 = vmul.f32 %v795, 1.442695
        %v931 = vpow.pop %v930
        %v932 = vmul.f32 %v801, 1.442695
        %v933 = vpow.pop %v932
        %v934 = vmul.f32 %v928, %v931
        %v935 = vmul.f32 %v929, %v933
        %vm936 = vcmp.gt.f32.partialorder %v867, 0.5
        %vm937 = vcmp.gt.f32.partialorder %v870, 0.5
        %v938 = vsel %vm936, %v934, 0.0
        %v939 = vsel %vm937, %v935, 0.0
        %940 = vst [vmem:[%s214] sm:$0xff] %v938
        %941 = vst [vmem:[%s214 + $0x8] sm:$0xff] %v939
        %s942 = sand.u32 %s96, 1
        %s943 = scalar_lea.sflag [#allocation7], %s942
        %s944 = sand.u32 %s96, 1
        %s945 = smul.addr %s944, 16
        %s946 = scalar_lea.vmem [#allocation10], %s945
        // Predicated region
        $region41: #{tpu_custom_call.1} parent=27 // pred_check
          %p947 = pneg %p106
        $region42: #{tpu_custom_call.1} parent=27 // pred_check_branch
          %949 = sbr.rel (%p947) target = $region44
        $region43: #{tpu_custom_call.1} parent=27 // pred_region
          %s950 = smul.u32 2, %s26
          %s952 = ssub.s32 256, 256
          %953 = vsyncadd %s943, %s952
          %s954 = smul.addr %s950, 2
          %s955 = sadd.s32 %s27, %s954
          %s956 = smul.addr %s955, 128
          %s957 = scalar_lea.hbm %s2, %s956
          %s958 = sshll.u32 %s946, 4
          %s959 = int_to_ptr.vmem [resolvable:$true] %s958
          %964 = dma.vmem_to_hbm [thread:$0]  %s959, 256, %s957, %s943, 128, 256, 8
        $region44: #{tpu_custom_call.1} parent=27 // pred_fallthru
          _
      $region28: #{tpu_custom_call.1} parent=5 // pred_fallthru
        _
      %p965 = scmp.le.s32.totalorder 2, %s17
      // Predicated region
      $region45: #{tpu_custom_call.1} parent=5 // pred_check
        %p966 = pneg %p965
      $region46: #{tpu_custom_call.1} parent=5 // pred_check_branch
        %968 = sbr.rel (%p966) target = $region48
      $region47: #{tpu_custom_call.1} parent=5 // pred_region
        %s969 = ssub.s32 %s17, 2
        // Predicated region
        $region49: #{tpu_custom_call.1} parent=47 // pred_check
          %p970 = pneg %p112
        $region50: #{tpu_custom_call.1} parent=47 // pred_check_branch
          %972 = sbr.rel (%p970) target = $region52
        $region51: #{tpu_custom_call.1} parent=47 // pred_region
          %s973 = sand.u32 %s97, 1
          %s974 = scalar_lea.sflag [#allocation7], %s973
          %s975 = sand.u32 %s97, 1
          %s976 = smul.addr %s975, 16
          %s977 = scalar_lea.vmem [#allocation10], %s976
          %978 = dma.done %s974, 256
        $region52: #{tpu_custom_call.1} parent=47 // pred_fallthru
          _
      $region48: #{tpu_custom_call.1} parent=5 // pred_fallthru
        _
    $region6: #{tpu_custom_call.1} parent=1 // loop_footer
      %s21 = sadd.s32 1, %s17
    $region7: #{tpu_custom_call.1} parent=1 // loop_footer_branch
      %16 = sbr.rel target = $region3
    $region8: #{tpu_custom_call.1} parent=1 // loop_exit
      _
    %979 = vsyncpa [#allocation6], 1
    %s980 = scalar_lea.sflag [#allocation6], 1
    %981 = vsyncpa %s980, 1
    %982 = vsyncpa [#allocation9], 1
    %s983 = scalar_lea.sflag [#allocation9], 1
    %984 = vsyncpa %s983, 1
    %985 = vsyncpa [#allocation7], 1
    %s986 = scalar_lea.sflag [#allocation7], 1
    %987 = vsyncpa %s986, 1

</llo_original>
